<compile_context>
chip_gen: v5e
topology: v5e:2x2
jax: 0.10.0
libtpu: 0.0.40
codegen_flags: <defaults>
</compile_context>

<pallas_src>
import functools

import numpy as np
import jax
import jax.numpy as jnp
from jax.experimental import pallas as pl
from jax.experimental.pallas import tpu as pltpu


_MASK_VALUE = -0.7 * float(np.finfo(np.float32).max)  # large finite negative (avoids inf-inf NaNs)


# --------------------------------------------------------------------------------------
# QKV projection: plain tiled linear layer  y = x @ W + b   (bf16 MXU, f32 accumulation)
# --------------------------------------------------------------------------------------
def _linear_kernel(x_ref, w_ref, b_ref, o_ref):
    y = jnp.dot(x_ref[0], w_ref[...], preferred_element_type=jnp.float32) + b_ref[0]
    o_ref[0] = y.astype(o_ref.dtype)


def _linear(x_bf16, w_bf16, b_f32, *, block_t, vmem_limit, out_dtype=jnp.bfloat16):
    B, T, c_in = x_bf16.shape
    c_out = w_bf16.shape[1]
    return pl.pallas_call(
        _linear_kernel,
        out_shape=jax.ShapeDtypeStruct((B, T, c_out), out_dtype),
        grid_spec=pltpu.PrefetchScalarGridSpec(
            num_scalar_prefetch=0,
            grid=(B, T // block_t),
            in_specs=[
                pl.BlockSpec((1, block_t, c_in), lambda b, ti: (b, ti, 0)),
                pl.BlockSpec((c_in, c_out), lambda b, ti: (0, 0)),   # weight: fetched once
                pl.BlockSpec((1, c_out), lambda b, ti: (0, 0)),      # bias
            ],
            out_specs=pl.BlockSpec((1, block_t, c_out), lambda b, ti: (b, ti, 0)),
        ),
        compiler_params=pltpu.CompilerParams(
            dimension_semantics=("parallel", "parallel"),
            vmem_limit_bytes=vmem_limit),
    )(x_bf16, w_bf16, b_f32)


# --------------------------------------------------------------------------------------
# Flash attention (causal) with the output projection fused in.
# --------------------------------------------------------------------------------------
def _online_softmax_step(q, kj, vj, m, l, acc, mask=None):
    """One kv block of the online-softmax recurrence.  All matmuls head-batched."""
    s = jnp.einsum('hqd,hkd->hqk', q, kj,
                   preferred_element_type=jnp.float32)          # (H, bq, bk) f32
    if mask is not None:
        s = jnp.where(mask, s, _MASK_VALUE)
    m_new = jnp.maximum(m, jnp.max(s, axis=-1, keepdims=True))
    alpha = jnp.exp(m - m_new)
    p = jnp.exp(s - m_new)                                       # masked -> exp(-huge) = 0
    l_new = alpha * l + jnp.sum(p, axis=-1, keepdims=True)
    acc_new = alpha * acc + jnp.einsum('hqk,hkd->hqd', p.astype(jnp.bfloat16), vj,
                                       preferred_element_type=jnp.float32)
    return m_new, l_new, acc_new


def _flash_attn_proj_kernel(q_ref, k_ref, v_ref, wp_ref, bp_ref, o_ref, *,
                            n_heads: int, head_dim: int, block: int, scale: float):
    qi = pl.program_id(1)
    H, hd = n_heads, head_dim

    # q arrives pre-projected bf16 head-major; fold the 1/sqrt(hd) scale in once.
    q = (q_ref[0].astype(jnp.float32) * scale).astype(jnp.bfloat16)   # (H, block, hd)

    m0 = jnp.full((H, block, 1), _MASK_VALUE, dtype=jnp.float32)
    l0 = jnp.zeros((H, block, 1), dtype=jnp.float32)
    acc0 = jnp.zeros((H, block, hd), dtype=jnp.float32)

    def kv_block(j):
        off = pl.multiple_of(j * block, block)
        kj = k_ref[0, :, pl.ds(off, block), :]                        # (H, block, hd) bf16
        vj = v_ref[0, :, pl.ds(off, block), :]
        return kj, vj

    def body(j, carry):
        m, l, acc = carry
        kj, vj = kv_block(j)
        return _online_softmax_step(q, kj, vj, m, l, acc)             # no mask below diagonal

    # Causal early-exit: only visit kv blocks up to (and including) the diagonal.
    m, l, acc = jax.lax.fori_loop(0, qi, body, (m0, l0, acc0))

    # Diagonal block: the only one that needs the causal mask (built once, no per-iter iotas).
    kj, vj = kv_block(qi)
    row = jax.lax.broadcasted_iota(jnp.int32, (block, block), 0)
    col = jax.lax.broadcasted_iota(jnp.int32, (block, block), 1)
    m, l, acc = _online_softmax_step(q, kj, vj, m, l, acc, mask=(row >= col)[None, :, :])

    out = acc * pl.reciprocal(l, approx=True)                         # (H, block, hd) f32

    # Fused output projection, no head transpose: y[q,c] = sum_h out[h,q,:] @ Wp[h,:,c]
    y = jnp.einsum('hqd,hdc->hqc', out.astype(jnp.bfloat16), wp_ref[...],
                   preferred_element_type=jnp.float32)
    y = jnp.sum(y, axis=0) + bp_ref[0]                                # (block, C) lane-dense
    o_ref[0] = y.astype(o_ref.dtype)


# --------------------------------------------------------------------------------------
# Wrapper
# --------------------------------------------------------------------------------------
def _pick_block(total: int, target: int) -> int:
    """Largest divisor of `total` that is <= target and a multiple of 8; else `total`."""
    if total <= target:
        return total
    for b in range(target, 7, -1):
        if total % b == 0 and b % 8 == 0:
            return b
    return total


def _tpu_defaults():
    """(block, vmem_limit_bytes) per TPU generation."""
    kind = ""
    try:
        kind = jax.devices()[0].device_kind.lower()
    except Exception:
        pass
    if "v5e" in kind or "v5 lite" in kind or "v5litepod" in kind:
        return 128, 64 * 1024 * 1024          # 128x128 MXU, ~800 GB/s HBM
    if "v6" in kind or "trillium" in kind:
        return 512, 100 * 1024 * 1024         # 128 MiB physical VMEM: big tiles
    if "v7" in kind:
        return 256, 48 * 1024 * 1024          # 64 MiB per-TC VMEM: leave headroom
    return 256, 64 * 1024 * 1024


def causal_self_attention(x, w_qkv, b_qkv, w_proj, b_proj, *, n_heads: int,
                          block: int = None, block_t: int = None):
    """x: (B, T, C) f32.  w_qkv: (C, 3C), b_qkv: (1, 3C), w_proj: (C, C), b_proj: (1, C).

    Weights are pre-transposed to (in, out) layout. block == block_q == block_k.
    """
    B, T, C = x.shape
    H = n_heads
    hd = C // H

    default_block, vmem_limit = _tpu_defaults()
    block = _pick_block(T, block if block is not None else default_block)
    block_t = _pick_block(T, block_t if block_t is not None else default_block)

    # bf16 wrapper-side casts: halve HBM read traffic and resident VMEM.
    x16 = x.astype(jnp.bfloat16)
    w_qkv16 = w_qkv.astype(jnp.bfloat16)
    w_proj16 = w_proj.reshape(H, hd, C).astype(jnp.bfloat16)   # head-major projection weight

    # ---- QKV projection: done exactly once (separate pallas_call), not per query block ----
    qkv = _linear(x16, w_qkv16, b_qkv, block_t=block_t, vmem_limit=vmem_limit)  # (B, T, 3C) bf16
    qkv = qkv.reshape(B, T, 3, H, hd)
    qkv = jnp.transpose(qkv, (2, 0, 3, 1, 4))                  # (3, B, H, T, hd), cheap XLA relayout
    q, k, v = qkv[0], qkv[1], qkv[2]

    kernel = functools.partial(
        _flash_attn_proj_kernel, n_heads=H, head_dim=hd, block=block,
        scale=float(1.0 / np.sqrt(hd)))

    return pl.pallas_call(
        kernel,
        out_shape=jax.ShapeDtypeStruct((B, T, C), x.dtype),
        grid_spec=pltpu.PrefetchScalarGridSpec(
            num_scalar_prefetch=0,
            grid=(B, T // block),
            in_specs=[
                pl.BlockSpec((1, H, block, hd), lambda b, qi: (b, 0, qi, 0)),  # q tile
                pl.BlockSpec((1, H, T, hd), lambda b, qi: (b, 0, 0, 0)),       # K (full seq, per b)
                pl.BlockSpec((1, H, T, hd), lambda b, qi: (b, 0, 0, 0)),       # V (full seq, per b)
                pl.BlockSpec((H, hd, C), lambda b, qi: (0, 0, 0)),             # W_proj (head-major)
                pl.BlockSpec((1, C), lambda b, qi: (0, 0)),                    # b_proj
            ],
            out_specs=pl.BlockSpec((1, block, C), lambda b, qi: (b, qi, 0)),   # lane-dense (block, C)
        ),
        compiler_params=pltpu.CompilerParams(
            dimension_semantics=("parallel", "parallel"),
            vmem_limit_bytes=vmem_limit),
    )(q, k, v, w_proj16, b_proj)


# --------------------------------------------------------------------------------------
# Reference & smoke test
# --------------------------------------------------------------------------------------
def _reference(x, w_qkv, b_qkv, w_proj, b_proj, n_heads):
    """Pure-JAX f32 reference mirroring the PyTorch forward (eval mode)."""
    B, T, C = x.shape
    hd = C // n_heads
    qkv = x @ w_qkv + b_qkv[0]                                 # (B, T, 3C)
    qkv = qkv.reshape(B, T, 3, n_heads, hd)
    qkv = jnp.transpose(qkv, (2, 0, 3, 1, 4))                  # (3, B, H, T, hd)
    q, k, v = qkv[0], qkv[1], qkv[2]
    att = jnp.einsum("bhtd,bhsd->bhts", q, k) / np.sqrt(hd)
    mask = jnp.triu(jnp.ones((T, T), dtype=bool), k=1)
    att = jnp.where(mask[None, None], -jnp.inf, att)
    att = jax.nn.softmax(att, axis=-1)
    out = jnp.einsum("bhts,bhsd->bhtd", att, v)
    out = jnp.transpose(out, (0, 2, 1, 3)).reshape(B, T, C)
    return out @ w_proj + b_proj[0]


if __name__ == "__main__":
    B, T, C = 2, 16, 32
    n_heads = 4

    key = jax.random.PRNGKey(0)
    kx, kw1, kb1, kw2, kb2 = jax.random.split(key, 5)

    x = jax.random.normal(kx, (B, T, C), dtype=jnp.float32)
    w_qkv = jax.random.normal(kw1, (C, 3 * C), dtype=jnp.float32) * 0.1
    b_qkv = jax.random.normal(kb1, (1, 3 * C), dtype=jnp.float32) * 0.1
    w_proj = jax.random.normal(kw2, (C, C), dtype=jnp.float32) * 0.1
    b_proj = jax.random.normal(kb2, (1, C), dtype=jnp.float32) * 0.1

    # block=8 with T=16 exercises both the below-diagonal fori_loop path and the
    # masked diagonal block.
    out = causal_self_attention(x, w_qkv, b_qkv, w_proj, b_proj,
                                n_heads=n_heads, block=8, block_t=16)
    out = jax.block_until_ready(out)

    ref = _reference(x, w_qkv, b_qkv, w_proj, b_proj, n_heads)
    # bf16 MXU (f32 accumulation) + EUP approx reciprocal -> loosened tolerance.
    np.testing.assert_allclose(np.asarray(out), np.asarray(ref), rtol=5e-2, atol=5e-2)

    print("KERNEL_OK")
</pallas_src>

<mosaic_0001>
module attributes {stable_mosaic.version = 11 : i64} {
  func.func @_linear_kernel(%arg0: i32, %arg1: i32, %arg2: memref<1x16x32xbf16, #tpu.memory_space<vmem>>, %arg3: memref<32x96xbf16, #tpu.memory_space<vmem>>, %arg4: memref<1x96xf32, #tpu.memory_space<vmem>>, %arg5: memref<1x16x96xbf16, #tpu.memory_space<vmem>>) attributes {dimension_semantics = [#tpu.dimension_semantics<parallel>, #tpu.dimension_semantics<parallel>], iteration_bounds = array<i64: 2, 1>, scalar_prefetch = 0 : i64, scratch_operands = 0 : i64, tpu.core_type = #tpu.core_type<tc>, window_params = [{transform_indices = @transform_0, window_bounds = array<i64: 1, 16, 32>}, {pipeline_mode = #tpu.pipeline_mode<synchronous>, transform_indices = @transform_1, window_bounds = array<i64: 32, 96>}, {pipeline_mode = #tpu.pipeline_mode<synchronous>, transform_indices = @transform_2, window_bounds = array<i64: 1, 96>}, {transform_indices = @transform_3, window_bounds = array<i64: 1, 16, 96>}]} {
    %c0 = arith.constant 0 : index
    %c0_0 = arith.constant 0 : index
    %c0_1 = arith.constant 0 : index
    %0 = vector.load %arg2[%c0, %c0_0, %c0_1] : memref<1x16x32xbf16, #tpu.memory_space<vmem>>, vector<1x16x32xbf16>
    %1 = vector.shape_cast %0 : vector<1x16x32xbf16> to vector<16x32xbf16>
    %c0_2 = arith.constant 0 : index
    %c0_3 = arith.constant 0 : index
    %2 = vector.load %arg3[%c0_2, %c0_3] : memref<32x96xbf16, #tpu.memory_space<vmem>>, vector<32x96xbf16>
    %cst = arith.constant dense<0.000000e+00> : vector<16x96xf32>
    %3 = tpu.matmul %1, %2, %cst {dimension_numbers = #tpu.dot_dimension_numbers<[1], [0], [0], [1], [0, 0, 1, 1], [], []>} : vector<16x32xbf16>, vector<32x96xbf16>, vector<16x96xf32> -> vector<16x96xf32>
    %c0_4 = arith.constant 0 : index
    %c0_5 = arith.constant 0 : index
    %4 = vector.load %arg4[%c0_4, %c0_5] : memref<1x96xf32, #tpu.memory_space<vmem>>, vector<1x96xf32>
    %5 = vector.shape_cast %4 : vector<1x96xf32> to vector<96xf32>
    %6 = vector.shape_cast %5 : vector<96xf32> to vector<1x96xf32>
    %7 = vector.broadcast %6 : vector<1x96xf32> to vector<16x96xf32>
    %8 = arith.addf %3, %7 : vector<16x96xf32>
    %9 = arith.truncf %8 : vector<16x96xf32> to vector<16x96xbf16>
    %c0_6 = arith.constant 0 : index
    %c0_7 = arith.constant 0 : index
    %c0_8 = arith.constant 0 : index
    %10 = vector.load %arg5[%c0_6, %c0_7, %c0_8] : memref<1x16x96xbf16, #tpu.memory_space<vmem>>, vector<1x16x96xbf16>
    %11 = vector.shape_cast %10 : vector<1x16x96xbf16> to vector<16x96xbf16>
    %12 = vector.shape_cast %9 : vector<16x96xbf16> to vector<1x16x96xbf16>
    tpu.vector_store %arg5[%c0_6, %c0_7, %c0_8], %12 {strides = array<i32>} : memref<1x16x96xbf16, #tpu.memory_space<vmem>>, vector<1x16x96xbf16>,
    return
  }
  func.func @transform_0(%arg0: i32, %arg1: i32) -> (i32, i32, i32) {
    %c0_i32 = arith.constant 0 : i32
    %c0_i32_0 = arith.constant 0 : i32
    return %arg0, %arg1, %c0_i32 : i32, i32, i32
  }
  func.func @transform_1(%arg0: i32, %arg1: i32) -> (i32, i32) {
    %c0_i32 = arith.constant 0 : i32
    %c0_i32_0 = arith.constant 0 : i32
    %c0_i32_1 = arith.constant 0 : i32
    return %c0_i32, %c0_i32_0 : i32, i32
  }
  func.func @transform_2(%arg0: i32, %arg1: i32) -> (i32, i32) {
    %c0_i32 = arith.constant 0 : i32
    %c0_i32_0 = arith.constant 0 : i32
    %c0_i32_1 = arith.constant 0 : i32
    return %c0_i32, %c0_i32_0 : i32, i32
  }
  func.func @transform_3(%arg0: i32, %arg1: i32) -> (i32, i32, i32) {
    %c0_i32 = arith.constant 0 : i32
    %c0_i32_0 = arith.constant 0 : i32
    return %arg0, %arg1, %c0_i32 : i32, i32, i32
  }
}

</mosaic_0001>

<llo_original>
// kernel: tpu_custom_call.1
$region0: #{tpu_custom_call.1}
  #allocation0 [shape = 'u32[]', space=smem, size = 0x4, offset = 0x4, fixed_abs, tag = 'smem constant byte address 0x4 - core index']
  #allocation1 [shape = 'u32[72,128]{1,0:T(1,128)}', space=vmem, size = 0x9000, scoped, tag = 'internal scratch']
  %s0 = inlined_call_operand.hbm [shape: bf16[2,16,32], index: 0, kind: input, shape index: {}]
  %s1 = inlined_call_operand.hbm [shape: bf16[32,96], index: 1, kind: input, shape index: {}]
  %s2 = inlined_call_operand.vmem [shape: f32[1,96], index: 2, kind: input, shape index: {}]
  %s3 = inlined_call_operand.hbm [shape: bf16[2,16,96], index: 3, kind: output, shape index: {}]
  %s4 = sld [smem:[#allocation0]]
  $region53: #{tpu_custom_call.1} parent=0
    _
  %s6 = ssub.s32 1, %s4
  %s7 = scalar_select 0, %s6, %s4
  $region1: #{tpu_custom_call.1} parent=0
    #allocation2 [shape = 'u8[8192]{0}', space=vmem, size = 0x2000, scoped, tag = 'input window, operand 0']
    #allocation3 [shape = 's32[2]{0}', space=sflag, size = 0x8, scoped, tag = 'scoped memory for tpu_custom_call.1']
    #allocation4 [shape = 's32[2]{0}', space=sflag, size = 0x8, scoped, tag = 'scoped memory for tpu_custom_call.1']
    #allocation5 [shape = 'u8[8192]{0}', space=vmem, size = 0x2000, scoped, tag = 'input window, operand 1, single buffered']
    #allocation6 [shape = 's32[1]{0}', space=sflag, size = 0x4, scoped, tag = 'scoped memory for tpu_custom_call.1']
    #allocation7 [shape = 'u8[8192]{0}', space=vmem, size = 0x2000, scoped, tag = 'output window, operand 0']
    %8 = vsyncpa [#allocation3], 0
    %s9 = scalar_lea.sflag [#allocation3], 1
    %10 = vsyncpa %s9, 0
    %11 = vsyncpa [#allocation6], 0
    %12 = vsyncpa [#allocation4], 0
    %s13 = scalar_lea.sflag [#allocation4], 1
    %14 = vsyncpa %s13, 0
    loop: start=0, step=1, limit=4
    $region2: #{tpu_custom_call.1} parent=1 // loop_pre_header
      _
    $region3: #{tpu_custom_call.1} parent=1 // loop_header
      %s16 = sphi 0, %s20
      %p17 = scmp.ge.s32.totalorder %s16, 4
      %s23 = sphi 0, %s35
      %s24 = sphi 0, %s31
      %s25 = sphi 0, %s23
      %s26 = sphi 0, %s24
      %s27 = sphi 0, %s25
      %s28 = sphi 0, %s26
      %s40 = sphi 0, %s42
      %s43 = sphi 0, %s40
      %s44 = sphi 0, %s43
      %s60 = sphi 0, %s44
      %s64 = sphi 0, %s64
      %s66 = sphi 0, %s64
      %s67 = sphi 0, %s66
      %s81 = sphi 0, %s67
      %s85 = sphi 0, %s85
      %s87 = sphi 0, %s85
      %s88 = sphi 0, %s87
      %s102 = sphi 0, %s88
      %s110 = sphi 0, %s112
      %s113 = sphi 0, %s110
      %s114 = sphi 0, %s113
      %s130 = sphi 0, %s114
    $region4: #{tpu_custom_call.1} parent=1 // loop_header_branch
      %19 = sbr.rel (%p17) target = $region8
    $region5: #{tpu_custom_call.1} parent=1 // loop_body
      %s21 = ssub.s32 %s16, 1
      %s22 = ssub.s32 %s16, 2
      %s29 = sadd.s32 1, %s24
      %p30 = scmp.ge.s32.totalorder %s29, 1
      %s31 = scalar_select %p30, 0, %s29
      %s32 = sadd.s32 1, %s23
      %s33 = scalar_select %p30, %s32, %s23
      %p34 = scmp.ge.s32.totalorder %s33, 2
      %s35 = scalar_select %p34, 0, %s33
      %s36 = ssub.s32 %s23, %s35
      %s37 = ssub.s32 %s24, %s31
      %s38 = sor.u32 %s36, %s37
      %p39 = scmp.eq.s32.totalorder %s38, 0
      %s41 = sadd.s32 %s40, 1
      %s42 = scalar_select %p39, %s40, %s41
      %p45 = pneg %p39
      %p46 = scmp.eq.s32.totalorder %s16, 1
      %p47 = por %p45, %p46
      %p48 = scmp.ne.s32.totalorder %s40, %s43
      %p49 = scmp.eq.s32.totalorder %s16, 0
      %p50 = por %p48, %p49
      %p51 = scmp.ne.s32.totalorder %s40, %s43
      %p52 = scmp.eq.s32.totalorder %s21, 1
      %p53 = por %p51, %p52
      %p54 = scmp.ne.s32.totalorder %s43, %s44
      %p55 = scmp.eq.s32.totalorder %s21, 0
      %p56 = por %p54, %p55
      %p57 = scmp.ne.s32.totalorder %s43, %s44
      %p58 = scmp.eq.s32.totalorder %s22, 1
      %p59 = por %p57, %p58
      %p61 = scmp.ne.s32.totalorder %s44, %s60
      %p62 = scmp.eq.s32.totalorder %s22, 0
      %p63 = por %p61, %p62
      %s65 = sadd.s32 %s64, 1
      %p68 = scmp.eq.s32.totalorder %s16, 1
      %p69 = scmp.ne.s32.totalorder %s64, %s66
      %p70 = scmp.eq.s32.totalorder %s16, 0
      %p71 = por %p69, %p70
      %p72 = scmp.ne.s32.totalorder %s64, %s66
      %p73 = scmp.eq.s32.totalorder %s21, 1
      %p74 = por %p72, %p73
      %p75 = scmp.ne.s32.totalorder %s66, %s67
      %p76 = scmp.eq.s32.totalorder %s21, 0
      %p77 = por %p75, %p76
      %p78 = scmp.ne.s32.totalorder %s66, %s67
      %p79 = scmp.eq.s32.totalorder %s22, 1
      %p80 = por %p78, %p79
      %p82 = scmp.ne.s32.totalorder %s67, %s81
      %p83 = scmp.eq.s32.totalorder %s22, 0
      %p84 = por %p82, %p83
      %s86 = sadd.s32 %s85, 1
      %p89 = scmp.eq.s32.totalorder %s16, 1
      %p90 = scmp.ne.s32.totalorder %s85, %s87
      %p91 = scmp.eq.s32.totalorder %s16, 0
      %p92 = por %p90, %p91
      %p93 = scmp.ne.s32.totalorder %s85, %s87
      %p94 = scmp.eq.s32.totalorder %s21, 1
      %p95 = por %p93, %p94
      %p96 = scmp.ne.s32.totalorder %s87, %s88
      %p97 = scmp.eq.s32.totalorder %s21, 0
      %p98 = por %p96, %p97
      %p99 = scmp.ne.s32.totalorder %s87, %s88
      %p100 = scmp.eq.s32.totalorder %s22, 1
      %p101 = por %p99, %p100
      %p103 = scmp.ne.s32.totalorder %s88, %s102
      %p104 = scmp.eq.s32.totalorder %s22, 0
      %p105 = por %p103, %p104
      %s106 = ssub.s32 %s23, %s35
      %s107 = ssub.s32 %s24, %s31
      %s108 = sor.u32 %s106, %s107
      %p109 = scmp.eq.s32.totalorder %s108, 0
      %s111 = sadd.s32 %s110, 1
      %s112 = scalar_select %p109, %s110, %s111
      %p115 = pneg %p109
      %p116 = scmp.eq.s32.totalorder %s16, 1
      %p117 = por %p115, %p116
      %p118 = scmp.ne.s32.totalorder %s110, %s113
      %p119 = scmp.eq.s32.totalorder %s16, 0
      %p120 = por %p118, %p119
      %p121 = scmp.ne.s32.totalorder %s110, %s113
      %p122 = scmp.eq.s32.totalorder %s21, 1
      %p123 = por %p121, %p122
      %p124 = scmp.ne.s32.totalorder %s113, %s114
      %p125 = scmp.eq.s32.totalorder %s21, 0
      %p126 = por %p124, %p125
      %p127 = scmp.ne.s32.totalorder %s113, %s114
      %p128 = scmp.eq.s32.totalorder %s22, 1
      %p129 = por %p127, %p128
      %p131 = scmp.ne.s32.totalorder %s114, %s130
      %p132 = scmp.eq.s32.totalorder %s22, 0
      %p133 = por %p131, %p132
      %p134 = scmp.le.s32.totalorder 1, %s16
      %p135 = scmp.lt.s32.totalorder %s16, 3
      %p136 = pnand %p134, %p135
      %p137 = pneg %p136
      // Predicated region
      $region9: #{tpu_custom_call.1} parent=5 // pred_check
        _
      $region10: #{tpu_custom_call.1} parent=5 // pred_check_branch
        %139 = sbr.rel (%p136) target = $region12
      $region11: #{tpu_custom_call.1} parent=5 // pred_region
        %s140 = ssub.s32 %s16, 1
        // Predicated region
        $region13: #{tpu_custom_call.1} parent=11 // pred_check
          %p141 = pneg %p77
        $region14: #{tpu_custom_call.1} parent=11 // pred_check_branch
          %143 = sbr.rel (%p141) target = $region16
        $region15: #{tpu_custom_call.1} parent=11 // pred_region
          %145 = vsyncadd [#allocation6], 0
          %s146 = sshll.u32 %s1, 4
          %s147 = int_to_ptr.hbm [resolvable:$true] %s146
          %s148 = sshll.u32 [#allocation5], 4
          %s149 = int_to_ptr.vmem [resolvable:$true] %s148
          %154 = dma.hbm_to_vmem [thread:$0]  %s147, 256, %s149, [#allocation6], 64, 64, 4
        $region16: #{tpu_custom_call.1} parent=11 // pred_fallthru
          _
        // Predicated region
        $region17: #{tpu_custom_call.1} parent=11 // pred_check
          %p155 = pneg %p98
        $region18: #{tpu_custom_call.1} parent=11 // pred_check_branch
          %157 = sbr.rel (%p155) target = $region20
        $region19: #{tpu_custom_call.1} parent=11 // pred_region
          _
        $region20: #{tpu_custom_call.1} parent=11 // pred_fallthru
          _
      $region12: #{tpu_custom_call.1} parent=5 // pred_fallthru
        _
      %p158 = scmp.lt.s32.totalorder %s16, 2
      // Predicated region
      $region21: #{tpu_custom_call.1} parent=5 // pred_check
        %p159 = pneg %p158
      $region22: #{tpu_custom_call.1} parent=5 // pred_check_branch
        %161 = sbr.rel (%p159) target = $region24
      $region23: #{tpu_custom_call.1} parent=5 // pred_region
        // Predicated region
        $region25: #{tpu_custom_call.1} parent=23 // pred_check
          %p162 = pneg %p50
        $region26: #{tpu_custom_call.1} parent=23 // pred_check_branch
          %164 = sbr.rel (%p162) target = $region28
        $region27: #{tpu_custom_call.1} parent=23 // pred_region
          %s165 = sand.u32 %s40, 1
          %s166 = scalar_lea.sflag [#allocation3], %s165
          %s167 = sand.u32 %s40, 1
          %s168 = smul.addr %s167, 8
          %s169 = scalar_lea.vmem [#allocation2], %s168
          %s170 = smul.u32 2, %s24
          %172 = vsyncadd %s166, 0
          %s173 = smul.addr %s23, 2
          %s174 = sadd.s32 %s170, %s173
          %s175 = smul.addr %s174, 4
          %s176 = scalar_lea.hbm %s0, %s175
          %s177 = sshll.u32 %s176, 4
          %s178 = int_to_ptr.hbm [resolvable:$true] %s177
          %s179 = sshll.u32 %s169, 4
          %s180 = int_to_ptr.vmem [resolvable:$true] %s179
          %185 = dma.hbm_to_vmem [thread:$0]  %s178, 128, %s180, %s166, 64, 64, 4
        $region28: #{tpu_custom_call.1} parent=23 // pred_fallthru
          _
      $region24: #{tpu_custom_call.1} parent=5 // pred_fallthru
        _
      %p186 = scmp.le.s32.totalorder 1, %s16
      %p187 = scmp.lt.s32.totalorder %s16, 3
      %p188 = pnand %p186, %p187
      %p189 = pneg %p188
      // Predicated region
      $region29: #{tpu_custom_call.1} parent=5 // pred_check
        _
      $region30: #{tpu_custom_call.1} parent=5 // pred_check_branch
        %191 = sbr.rel (%p188) target = $region32
      $region31: #{tpu_custom_call.1} parent=5 // pred_region
        %s192 = ssub.s32 %s16, 1
        %s193 = sand.u32 %s43, 1
        %s194 = scalar_lea.sflag [#allocation3], %s193
        %s195 = sand.u32 %s43, 1
        %s196 = smul.addr %s195, 8
        %s197 = scalar_lea.vmem [#allocation2], %s196
        // Predicated region
        $region33: #{tpu_custom_call.1} parent=31 // pred_check
          %p198 = pneg %p56
        $region34: #{tpu_custom_call.1} parent=31 // pred_check_branch
          %200 = sbr.rel (%p198) target = $region36
        $region35: #{tpu_custom_call.1} parent=31 // pred_region
          %202 = dma.done %s194, 128
        $region36: #{tpu_custom_call.1} parent=31 // pred_fallthru
          _
        // Predicated region
        $region37: #{tpu_custom_call.1} parent=31 // pred_check
          %p203 = pneg %p77
        $region38: #{tpu_custom_call.1} parent=31 // pred_check_branch
          %205 = sbr.rel (%p203) target = $region40
        $region39: #{tpu_custom_call.1} parent=31 // pred_region
          %207 = dma.done [#allocation6], 256
        $region40: #{tpu_custom_call.1} parent=31 // pred_fallthru
          _
        %s208 = sand.u32 %s43, 1
        %s209 = scalar_lea.sflag [#allocation3], %s208
        %s210 = sand.u32 %s43, 1
        %s211 = smul.addr %s210, 8
        %s212 = scalar_lea.vmem [#allocation2], %s211
        %p213 = pneg %p56
        %p214 = pneg %p53
        %p215 = pneg %p77
        %p216 = pneg %p74
        %p217 = pneg %p98
        %p218 = pneg %p95
        %p219 = pneg %p126
        %p220 = pneg %p123
        %s221 = sand.u32 %s113, 1
        %s222 = scalar_lea.sflag [#allocation4], %s221
        %s223 = sand.u32 %s113, 1
        %s224 = smul.addr %s223, 8
        %s225 = scalar_lea.vmem [#allocation7], %s224
        %s226 = smul.u32 2, %s26
        %s227 = smul.u32 2, %s26
        %v229 = vld [vmem:[%s197] sm:$0xf]
        %v230 = vld [vmem:[%s197 + $0x4] sm:$0xf]
        %v231 = vld [vmem:[#allocation5] sm:$0xf]
        %v232 = vld [vmem:[#allocation5 + $0x4] sm:$0xf]
        %v233 = vld [vmem:[#allocation5 + $0x8] sm:$0xf]
        %v234 = vld [vmem:[#allocation5 + $0xc] sm:$0xf]
        %v235 = vld [vmem:[%s2] sm:$0x1]
        %v237 = vperm.slane %v235, 0
        %v241 = vunpack.c.l.b16 %v229
        %v242 = vunpack.c.l.b16 %v230
        %v243 = vpack.c.b16 %v242, %v241
        %v248 = vunpack.c.l.b16 %v231
        %v249 = vunpack.c.l.b16 %v232
        %v250 = vunpack.c.l.b16 %v233
        %v251 = vunpack.c.l.b16 %v234
        %v252 = vpack.c.b16 %v249, %v248
        %v253 = vpack.c.b16 %v251, %v250
        %vm256 = vcmask 261120
        %v258 = vsel %vm256, %v243, 0
        %260 = vmatpush.bf16.msra.mxu0 0
        %261 = vmatpush.bf16.msra.mxu0 0
        %262 = vmatpush.bf16.msra.mxu0 0
        %263 = vmatpush.bf16.msra.mxu0 0
        %264 = vmatpush.bf16.msra.mxu0 0
        %265 = vmatpush.bf16.msra.mxu0 0
        %266 = vmatpush.bf16.msra.mxu0 %v253
        %267 = vmatpush.bf16.msra.mxu0 %v252
        %268 = vmatmul.bf16.gmra.mxu0 %v258
        %v269 = vpop.f32.mrf.mxu0
        %v270 = vadd.f32 %v237, %v269
        %v271 = vpop.f32.mrf.mxu0
        %v272 = vadd.f32 %v237, %v271
        %273 = vdwg.mxu0
        %v274 = vpack.c.bf16 %v270, %v270
        %v275 = vpack.c.bf16 %v272, %v272
        %vm276 = vcmask 781312
        %277 = vst.msk [vmem:[%s225] sm:$0xf] %vm276, %v274
        %278 = vst.msk [vmem:[%s225 + $0x4] sm:$0xf] %vm276, %v275
        %s279 = sand.u32 %s113, 1
        %s280 = scalar_lea.sflag [#allocation4], %s279
        %s281 = sand.u32 %s113, 1
        %s282 = smul.addr %s281, 8
        %s283 = scalar_lea.vmem [#allocation7], %s282
        // Predicated region
        $region41: #{tpu_custom_call.1} parent=31 // pred_check
          %p284 = pneg %p123
        $region42: #{tpu_custom_call.1} parent=31 // pred_check_branch
          %286 = sbr.rel (%p284) target = $region44
        $region43: #{tpu_custom_call.1} parent=31 // pred_region
          %s287 = smul.u32 2, %s26
          %289 = vsyncadd %s280, 0
          %s290 = smul.addr %s25, 2
          %s291 = sadd.s32 %s287, %s290
          %s292 = smul.addr %s291, 4
          %s293 = scalar_lea.hbm %s3, %s292
          %s294 = sshll.u32 %s283, 4
          %s295 = int_to_ptr.vmem [resolvable:$true] %s294
          %s296 = sshll.u32 %s293, 4
          %s297 = int_to_ptr.hbm [resolvable:$true] %s296
          %302 = dma.vmem_to_hbm [thread:$0]  %s295, 128, %s297, %s280, 64, 64, 4
        $region44: #{tpu_custom_call.1} parent=31 // pred_fallthru
          _
      $region32: #{tpu_custom_call.1} parent=5 // pred_fallthru
        _
      %p303 = scmp.le.s32.totalorder 2, %s16
      // Predicated region
      $region45: #{tpu_custom_call.1} parent=5 // pred_check
        %p304 = pneg %p303
      $region46: #{tpu_custom_call.1} parent=5 // pred_check_branch
        %306 = sbr.rel (%p304) target = $region48
      $region47: #{tpu_custom_call.1} parent=5 // pred_region
        %s307 = ssub.s32 %s16, 2
        // Predicated region
        $region49: #{tpu_custom_call.1} parent=47 // pred_check
          %p308 = pneg %p129
        $region50: #{tpu_custom_call.1} parent=47 // pred_check_branch
          %310 = sbr.rel (%p308) target = $region52
        $region51: #{tpu_custom_call.1} parent=47 // pred_region
          %s311 = sand.u32 %s114, 1
          %s312 = scalar_lea.sflag [#allocation4], %s311
          %s313 = sand.u32 %s114, 1
          %s314 = smul.addr %s313, 8
          %s315 = scalar_lea.vmem [#allocation7], %s314
          %317 = dma.done %s312, 128
        $region52: #{tpu_custom_call.1} parent=47 // pred_fallthru
          _
      $region48: #{tpu_custom_call.1} parent=5 // pred_fallthru
        _
    $region6: #{tpu_custom_call.1} parent=1 // loop_footer
      %s20 = sadd.s32 1, %s16
    $region7: #{tpu_custom_call.1} parent=1 // loop_footer_branch
      %15 = sbr.rel target = $region3
    $region8: #{tpu_custom_call.1} parent=1 // loop_exit
      _
    %318 = vsyncpa [#allocation3], 1
    %s319 = scalar_lea.sflag [#allocation3], 1
    %320 = vsyncpa %s319, 1
    %321 = vsyncpa [#allocation6], 1
    %322 = vsyncpa [#allocation4], 1
    %s323 = scalar_lea.sflag [#allocation4], 1
    %324 = vsyncpa %s323, 1

</llo_original>
